<compile_context>
chip_gen: v6e
topology: v6e:2x2x1
jax: 0.10.0
libtpu: 0.0.40
codegen_flags: <defaults>
</compile_context>

<pallas_src>
import functools
import math

import jax
import jax.numpy as jnp
from jax.experimental import pallas as pl
from jax.experimental.pallas import tpu as pltpu


def make_positional_encoding(d_model: int, max_len: int = 5000) -> jnp.ndarray:
    """Builds the same `pe` buffer as the PyTorch __init__.

    Returns pe of shape (max_len, 1, d_model), float32.
    """
    position = jnp.arange(0, max_len, dtype=jnp.float32)[:, None]          # (max_len, 1)
    div_term = jnp.exp(
        jnp.arange(0, d_model, 2, dtype=jnp.float32) * (-math.log(10000.0) / d_model)
    )                                                                       # (d_model//2,)
    angles = position * div_term                                            # (max_len, d_model//2)
    pe = jnp.zeros((max_len, d_model), dtype=jnp.float32)
    pe = pe.at[:, 0::2].set(jnp.sin(angles))
    pe = pe.at[:, 1::2].set(jnp.cos(angles))
    return pe[:, None, :]                                                   # (max_len, 1, d_model)


def _pe_add_kernel(x_ref, pe_ref, o_ref, *, batch: int, d_model: int):
    # x_ref/o_ref: (ts, batch*d_model)   pe_ref: (ts, d_model)
    pe_tile = pe_ref[...]  # loaded once per grid step, reused for every batch chunk
    for b in range(batch):  # static unroll; each chunk is a (ts, d_model) lane slab
        sl = slice(b * d_model, (b + 1) * d_model)
        o_ref[:, sl] = (x_ref[:, sl] + pe_tile).astype(o_ref.dtype)
    # TODO(synk): training-mode dropout (p=0.1) not applied; this reproduces
    # eval() semantics where nn.Dropout is the identity.


def _choose_row_tile(seq_len: int, batch: int, d_model: int, itemsize: int,
                     vmem_budget_bytes: int = 12 << 20) -> int:
    """Pick a sequence-row tile: multiple of 8, <=512 rows, and small enough that
    double-buffered x/out ((ts, B*D) each) + double-buffered pe ((ts, D)) stay
    well under the smallest default scoped-VMEM limit (v5e: 16 MiB, v7x: 32 MiB).
    """
    bytes_per_row = (4 * batch + 2) * d_model * itemsize
    ts = int(vmem_budget_bytes // max(1, bytes_per_row))
    ts = max(8, min(512, ts))
    ts = (ts // 8) * 8
    if seq_len < ts:
        ts = ((seq_len + 7) // 8) * 8  # single (possibly ragged) block, still 8-aligned
    return ts


def positional_encoding_forward(x: jnp.ndarray, pe: jnp.ndarray, *, row_tile: int | None = None) -> jnp.ndarray:
    """x: (seq_len, batch, d_model); pe: (max_len, 1, d_model). Returns x + pe[:seq_len]."""
    S, B, D = x.shape
    max_len = pe.shape[0]
    assert pe.shape == (max_len, 1, D), "pe buffer shape mismatch"
    if pe.dtype != x.dtype:
        pe = pe.astype(x.dtype)  # single dtype through the VPU; halves pe read for bf16 x

    x2 = x.reshape(S, B * D)        # free: contiguous merge of (B, D) onto lanes
    pe2 = pe.reshape(max_len, D)    # free: squeeze of the size-1 batch dim

    ts = row_tile if row_tile is not None else _choose_row_tile(
        S, B, D, jnp.dtype(x.dtype).itemsize)
    grid = (pl.cdiv(S, ts),)

    out2 = pl.pallas_call(
        functools.partial(_pe_add_kernel, batch=B, d_model=D),
        out_shape=jax.ShapeDtypeStruct((S, B * D), x.dtype),
        grid_spec=pl.GridSpec(
            grid=grid,
            in_specs=[
                # x tile: ts sequence rows, full (batch*d_model) lane width
                pl.BlockSpec((ts, B * D), lambda i: (i, 0)),
                # pe window taken straight from the full (max_len, D) buffer
                pl.BlockSpec((ts, D), lambda i: (i, 0)),
            ],
            out_specs=pl.BlockSpec((ts, B * D), lambda i: (i, 0)),
        ),
        compiler_params=pltpu.CompilerParams(
            # independent row tiles -> shard across both TensorCores on v7x
            dimension_semantics=("parallel",),
        ),
    )(x2, pe2)
    return out2.reshape(S, B, D)


if __name__ == "__main__":
    d_model = 128
    max_len = 64

    key = jax.random.PRNGKey(0)
    k1, k2 = jax.random.split(key)
    pe = make_positional_encoding(d_model, max_len)

    # Test 1: canonical small shape, auto-chosen tile (single block here).
    seq_len, batch = 8, 2
    x = jax.random.normal(k1, (seq_len, batch, d_model), dtype=jnp.float32)
    out = jax.block_until_ready(positional_encoding_forward(x, pe))
    ref = x + pe[:seq_len, :]
    assert out.shape == (seq_len, batch, d_model)
    assert jnp.allclose(out, ref, atol=1e-6), "mismatch vs reference (test 1)"

    # Test 2: multi-tile grid with a ragged last tile (3 tiles of 8 rows over S=20),
    # exercising pe windowing via the BlockSpec index_map across grid steps.
    seq_len2, batch2 = 20, 3
    x_b = jax.random.normal(k2, (seq_len2, batch2, d_model), dtype=jnp.float32)
    out_b = jax.block_until_ready(positional_encoding_forward(x_b, pe, row_tile=8))
    ref_b = x_b + pe[:seq_len2, :]
    assert out_b.shape == (seq_len2, batch2, d_model)
    assert jnp.allclose(out_b, ref_b, atol=1e-6), "mismatch vs reference (test 2)"

    print("KERNEL_OK")
</pallas_src>

<mosaic_0001>
module attributes {stable_mosaic.version = 11 : i64} {
  func.func @_pe_add_kernel(%arg0: i32, %arg1: memref<8x256xf32, #tpu.memory_space<vmem>>, %arg2: memref<8x128xf32, #tpu.memory_space<vmem>>, %arg3: memref<8x256xf32, #tpu.memory_space<vmem>>) attributes {dimension_semantics = [#tpu.dimension_semantics<parallel>], iteration_bounds = array<i64: 1>, scalar_prefetch = 0 : i64, scratch_operands = 0 : i64, tpu.core_type = #tpu.core_type<tc>, window_params = [{transform_indices = @transform_0, window_bounds = array<i64: 8, 256>}, {transform_indices = @transform_1, window_bounds = array<i64: 8, 128>}, {transform_indices = @transform_2, window_bounds = array<i64: 8, 256>}]} {
    %c0 = arith.constant 0 : index
    %c0_0 = arith.constant 0 : index
    %0 = vector.load %arg2[%c0, %c0_0] : memref<8x128xf32, #tpu.memory_space<vmem>>, vector<8x128xf32>
    %c0_1 = arith.constant 0 : index
    %c0_2 = arith.constant 0 : index
    %1 = vector.load %arg1[%c0_1, %c0_2] : memref<8x256xf32, #tpu.memory_space<vmem>>, vector<8x128xf32>
    %2 = arith.addf %1, %0 : vector<8x128xf32>
    %c0_3 = arith.constant 0 : index
    %c0_4 = arith.constant 0 : index
    %3 = vector.load %arg3[%c0_3, %c0_4] : memref<8x256xf32, #tpu.memory_space<vmem>>, vector<8x128xf32>
    tpu.vector_store %arg3[%c0_3, %c0_4], %2 {strides = array<i32>} : memref<8x256xf32, #tpu.memory_space<vmem>>, vector<8x128xf32>,
    %c0_5 = arith.constant 0 : index
    %c128 = arith.constant 128 : index
    %4 = vector.load %arg1[%c0_5, %c128] : memref<8x256xf32, #tpu.memory_space<vmem>>, vector<8x128xf32>
    %5 = arith.addf %4, %0 : vector<8x128xf32>
    %c0_6 = arith.constant 0 : index
    %c128_7 = arith.constant 128 : index
    %6 = vector.load %arg3[%c0_6, %c128_7] : memref<8x256xf32, #tpu.memory_space<vmem>>, vector<8x128xf32>
    tpu.vector_store %arg3[%c0_6, %c128_7], %5 {strides = array<i32>} : memref<8x256xf32, #tpu.memory_space<vmem>>, vector<8x128xf32>,
    return
  }
  func.func @transform_0(%arg0: i32) -> (i32, i32) {
    %c0_i32 = arith.constant 0 : i32
    %c0_i32_0 = arith.constant 0 : i32
    return %arg0, %c0_i32 : i32, i32
  }
  func.func @transform_1(%arg0: i32) -> (i32, i32) {
    %c0_i32 = arith.constant 0 : i32
    %c0_i32_0 = arith.constant 0 : i32
    return %arg0, %c0_i32 : i32, i32
  }
  func.func @transform_2(%arg0: i32) -> (i32, i32) {
    %c0_i32 = arith.constant 0 : i32
    %c0_i32_0 = arith.constant 0 : i32
    return %arg0, %c0_i32 : i32, i32
  }
}

</mosaic_0001>

<llo_original>
// kernel: tpu_custom_call.1
$region0: #{tpu_custom_call.1}
  #allocation0 [shape = 'u32[]', space=smem, size = 0x4, offset = 0x4, fixed_abs, tag = 'smem constant byte address 0x4 - core index']
  #allocation1 [shape = 'u32[144,128]{1,0:T(1,128)}', space=vmem, size = 0x12000, scoped, tag = 'internal scratch']
  %s0 = inlined_call_operand.hbm [shape: f32[8,256], index: 0, kind: input, shape index: {}]
  %s1 = inlined_call_operand.hbm [shape: f32[64,128], index: 1, kind: input, shape index: {}]
  %s2 = inlined_call_operand.hbm [shape: f32[8,256], index: 2, kind: output, shape index: {}]
  %s3 = sld [smem:[#allocation0]]
  $region26: #{tpu_custom_call.1} parent=0
    _
  %s5 = ssub.s32 1, %s3
  %s6 = scalar_select 0, %s5, %s3
  $region1: #{tpu_custom_call.1} parent=0
    #allocation2 [shape = 'u8[8192]{0}', space=vmem, size = 0x2000, scoped, tag = 'input window, operand 0, single buffered']
    #allocation3 [shape = 's32[1]{0}', space=sflag, size = 0x4, scoped, tag = 'scoped memory for tpu_custom_call.1']
    #allocation4 [shape = 's32[1]{0}', space=sflag, size = 0x4, scoped, tag = 'scoped memory for tpu_custom_call.1']
    #allocation5 [shape = 'u8[4096]{0}', space=vmem, size = 0x1000, scoped, tag = 'input window, operand 1, single buffered']
    #allocation6 [shape = 's32[1]{0}', space=sflag, size = 0x4, scoped, tag = 'scoped memory for tpu_custom_call.1']
    #allocation7 [shape = 'u8[8192]{0}', space=vmem, size = 0x2000, scoped, tag = 'output window, operand 0, single buffered']
    %7 = vsyncpa [#allocation3], 0
    %8 = vsyncpa [#allocation6], 0
    %9 = vsyncpa [#allocation4], 0
    // Predicated region
    $region2: #{tpu_custom_call.1} parent=1 // pred_check
      _
    $region3: #{tpu_custom_call.1} parent=1 // pred_check_branch
      %11 = sbr.rel (0) target = $region5
    $region4: #{tpu_custom_call.1} parent=1 // pred_region
      %s13 = ssub.s32 256, 256
      %14 = vsyncadd [#allocation3], %s13
      %s16 = sshll.u32 [#allocation2], 4
      %s17 = int_to_ptr.vmem [resolvable:$true] %s16
      %19 = dma.hbm_to_vmem [thread:$0]  %s0, 256, %s17, [#allocation3]
    $region5: #{tpu_custom_call.1} parent=1 // pred_fallthru
      _
    // Predicated region
    $region6: #{tpu_custom_call.1} parent=1 // pred_check
      _
    $region7: #{tpu_custom_call.1} parent=1 // pred_check_branch
      %21 = sbr.rel (0) target = $region9
    $region8: #{tpu_custom_call.1} parent=1 // pred_region
      %s23 = ssub.s32 128, 128
      %24 = vsyncadd [#allocation6], %s23
      %s26 = sshll.u32 [#allocation5], 4
      %s27 = int_to_ptr.vmem [resolvable:$true] %s26
      %29 = dma.hbm_to_vmem [thread:$0]  %s1, 128, %s27, [#allocation6]
    $region9: #{tpu_custom_call.1} parent=1 // pred_fallthru
      _
    // Predicated region
    $region10: #{tpu_custom_call.1} parent=1 // pred_check
      _
    $region11: #{tpu_custom_call.1} parent=1 // pred_check_branch
      %31 = sbr.rel (0) target = $region13
    $region12: #{tpu_custom_call.1} parent=1 // pred_region
      %32 = dma.done [#allocation3], 256
    $region13: #{tpu_custom_call.1} parent=1 // pred_fallthru
      _
    // Predicated region
    $region14: #{tpu_custom_call.1} parent=1 // pred_check
      _
    $region15: #{tpu_custom_call.1} parent=1 // pred_check_branch
      %34 = sbr.rel (0) target = $region17
    $region16: #{tpu_custom_call.1} parent=1 // pred_region
      %35 = dma.done [#allocation6], 128
    $region17: #{tpu_custom_call.1} parent=1 // pred_fallthru
      _
    %v36 = vld [vmem:[#allocation5] sm:$0xff]
    %v37 = vld [vmem:[#allocation2] sm:$0xff]
    %v38 = vadd.f32 %v37, %v36
    %39 = vst [vmem:[#allocation7] sm:$0xff] %v38
    %v40 = vld [vmem:[#allocation2 + $0x8] sm:$0xff]
    %v41 = vadd.f32 %v40, %v36
    %42 = vst [vmem:[#allocation7 + $0x8] sm:$0xff] %v41
    // Predicated region
    $region18: #{tpu_custom_call.1} parent=1 // pred_check
      _
    $region19: #{tpu_custom_call.1} parent=1 // pred_check_branch
      %44 = sbr.rel (0) target = $region21
    $region20: #{tpu_custom_call.1} parent=1 // pred_region
      %s46 = ssub.s32 256, 256
      %47 = vsyncadd [#allocation4], %s46
      %s49 = sshll.u32 [#allocation7], 4
      %s50 = int_to_ptr.vmem [resolvable:$true] %s49
      %52 = dma.vmem_to_hbm [thread:$0]  %s50, 256, %s2, [#allocation4]
    $region21: #{tpu_custom_call.1} parent=1 // pred_fallthru
      _
    // Predicated region
    $region22: #{tpu_custom_call.1} parent=1 // pred_check
      _
    $region23: #{tpu_custom_call.1} parent=1 // pred_check_branch
      %54 = sbr.rel (0) target = $region25
    $region24: #{tpu_custom_call.1} parent=1 // pred_region
      %55 = dma.done [#allocation4], 256
    $region25: #{tpu_custom_call.1} parent=1 // pred_fallthru
      _
    %56 = vsyncpa [#allocation3], 1
    %57 = vsyncpa [#allocation6], 1
    %58 = vsyncpa [#allocation4], 1

</llo_original>
